<compile_context>
chip_gen: v7x
topology: tpu7x:2x2x1
jax: 0.10.0
libtpu: 0.0.40
codegen_flags: <defaults>
</compile_context>

<pallas_src>
import functools

import jax
import jax.numpy as jnp
from jax.experimental import pallas as pl
from jax.experimental.pallas import tpu as pltpu

HIDDEN = 128


def _critic_kernel(x_ref, w1t_ref, b1_ref, w2_ref, b2_ref, w3_ref, b3_ref,
                   out_ref, *, n_states):
    # x:   (TB, n_states) f32   natural layout straight from HBM
    # w1t: (n_states, HIDDEN)   == PyTorch w1.T
    # b1:  (1, HIDDEN)
    # w2:  (HIDDEN, HIDDEN) bf16  (PyTorch (out, in) layout)
    # b2:  (HIDDEN, 1)
    # w3:  (HIDDEN, 1)            (column view of the PyTorch (1,128) weight)
    # b3:  (1, 1)
    # out: (1, TB)                lane-dense value row
    x = x_ref[...]
    w1t = w1t_ref[...]

    # ---- Layer 1: Linear(n_states -> 128), tiny K -> VPU outer products -----
    # Bias folded into the k=0 term (saves one full (TB,128) VALU add per tile).
    h = x[:, 0:1] * w1t[0:1, :] + b1_ref[...]
    for k in range(1, n_states):                      # static unroll (n_states = 4)
        h = h + x[:, k:k + 1] * w1t[k:k + 1, :]
    h1 = jnp.tanh(h)                                  # (TB, HIDDEN) f32
    # TODO(synk): confirm in the Mosaic dump that tanh lowers to the native EUP op.

    # Single well-shaped XLU transpose to feature-major (lane-dense from here on).
    h1t = jnp.transpose(h1)                           # (HIDDEN, TB)

    # ---- Layer 2: Linear(128 -> 128) on the MXU, bf16 operands, f32 accumulate.
    h2 = jnp.dot(w2_ref[...], h1t.astype(jnp.bfloat16),
                 preferred_element_type=jnp.float32)  # (HIDDEN, TB) f32
    h2 = jnp.tanh(h2 + b2_ref[...])

    # ---- Layer 3: Linear(128 -> 1) as VPU mul + XLU sublane reduction --------
    v = jnp.sum(h2 * w3_ref[...], axis=0, keepdims=True) + b3_ref[...]   # (1, TB)
    out_ref[...] = v.astype(out_ref.dtype)            # lane-dense store


def _choose_tiles(batch, max_tb=2048):
    """Pick (tb, num_tiles) with tb * num_tiles == batch.

    Prefer exactly 2 tiles (feeds both v7x TensorCores; only one extra ~0.35 us
    step on v5e/v6e vs. grid=1).  tb stays a multiple of 128 whenever tiled so
    the (1, tb) output block is lane-aligned; otherwise fall back to one
    full-extent block (no (8,128) constraint then).
    """
    if batch % 256 == 0:
        num_tiles, tb = 2, batch // 2
        while tb > max_tb and tb % 256 == 0:
            tb //= 2
            num_tiles *= 2
        return tb, num_tiles
    return batch, 1


def critic_net(state, params, *, lane_major_out=False):
    """state: (B, n_states) f32 -> (B, 1) f32 state value (or (1, B) if lane_major_out)."""
    w1, b1, w2, b2, w3, b3 = params           # PyTorch nn.Linear (out, in) layout
    B, n_states = state.shape
    tb, num_tiles = _choose_tiles(B)

    # Tiny per-call param relayouts (a few KiB; hoist out of the train loop if hot).
    w1t = w1.T                                # (n_states, HIDDEN)
    b1r = b1.reshape(1, HIDDEN)
    w2b = w2.astype(jnp.bfloat16)             # MXU-native operand; f32 accumulate in-kernel
    b2c = b2.reshape(HIDDEN, 1)
    w3c = w3.reshape(HIDDEN, 1)               # (1,128) -> (128,1), data-order preserving
    b3c = b3.reshape(1, 1)

    def resident(arr):                        # constant block index -> stays in VMEM
        return pl.BlockSpec(arr.shape, lambda i: (0, 0))

    flops = 2 * B * (n_states * HIDDEN + HIDDEN * HIDDEN + HIDDEN)
    bytes_accessed = (4 * (B * n_states + B + w1t.size + b1r.size + b2c.size
                           + w3c.size + b3c.size) + 2 * w2b.size)

    out = pl.pallas_call(
        functools.partial(_critic_kernel, n_states=n_states),
        out_shape=jax.ShapeDtypeStruct((1, B), jnp.float32),
        grid_spec=pltpu.PrefetchScalarGridSpec(
            num_scalar_prefetch=0,
            grid=(num_tiles,),
            in_specs=[
                pl.BlockSpec((tb, n_states), lambda i: (i, 0)),   # streamed x tile
                resident(w1t), resident(b1r),
                resident(w2b), resident(b2c),
                resident(w3c), resident(b3c),
            ],
            out_specs=pl.BlockSpec((1, tb), lambda i: (0, i)),    # lane-dense store
        ),
        compiler_params=pltpu.CompilerParams(
            dimension_semantics=("parallel",),    # shard batch tiles across TCs (v7x)
        ),
        cost_estimate=pl.CostEstimate(
            flops=flops,
            transcendentals=2 * B * HIDDEN,       # two tanh layers
            bytes_accessed=bytes_accessed,
        ),
    )(state, w1t, b1r, w2b, b2c, w3c, b3c)

    if lane_major_out:
        return out                            # (1, B): no (lanes -> sublanes) relayout
    return out.reshape(B, 1)                  # match PyTorch forward's (B, 1)


def init_params(key, n_states):
    """Deterministic synthetic params, PyTorch-Linear-style uniform init
    (PyTorch (out_features, in_features) weight layout)."""
    ks = jax.random.split(key, 6)

    def linear(kw, kb, fan_in, fan_out):
        bound = 1.0 / jnp.sqrt(float(fan_in))
        w = jax.random.uniform(kw, (fan_out, fan_in), jnp.float32, -bound, bound)
        b = jax.random.uniform(kb, (fan_out,), jnp.float32, -bound, bound)
        return w, b

    w1, b1 = linear(ks[0], ks[1], n_states, HIDDEN)
    w2, b2 = linear(ks[2], ks[3], HIDDEN, HIDDEN)
    w3, b3 = linear(ks[4], ks[5], HIDDEN, 1)
    return (w1, b1, w2, b2, w3, b3)


def critic_ref(state, params):
    """Pure-JAX f32 reference (matches PyTorch CriticNet.forward)."""
    w1, b1, w2, b2, w3, b3 = params
    h = jnp.tanh(state @ w1.T + b1)
    h = jnp.tanh(h @ w2.T + b2)
    return h @ w3.T + b3


def critic_ref_bf16_mxu(state, params):
    """Reference mimicking the kernel's bf16-at-the-MXU layer 2 (f32 accumulate)."""
    w1, b1, w2, b2, w3, b3 = params
    h1 = jnp.tanh(state @ w1.T + b1)
    z2 = jnp.dot(h1.astype(jnp.bfloat16), w2.T.astype(jnp.bfloat16),
                 preferred_element_type=jnp.float32)
    h2 = jnp.tanh(z2 + b2)
    return h2 @ w3.T + b3


if __name__ == "__main__":
    key = jax.random.PRNGKey(0)
    k_params, k_state = jax.random.split(key)

    n_states = 4          # InvertedPendulum observation dim
    batch = 256           # -> tb=128, grid=2 (both v7x TCs; two cheap steps elsewhere)

    params = init_params(k_params, n_states)
    state = jax.random.normal(k_state, (batch, n_states), jnp.float32)

    value = jax.block_until_ready(critic_net(state, params))
    assert value.shape == (batch, 1)

    ref_match = critic_ref_bf16_mxu(state, params)   # same bf16 rounding as kernel
    ref_f32 = critic_ref(state, params)              # exact f32 reference
    err_match = jnp.max(jnp.abs(value - ref_match))
    err_f32 = jnp.max(jnp.abs(value - ref_f32))
    assert jnp.allclose(value, ref_match, atol=5e-3, rtol=1e-2), (
        f"bf16-matched max abs err {err_match}")
    assert jnp.allclose(value, ref_f32, atol=3e-2, rtol=3e-2), (
        f"f32-reference max abs err {err_f32}")

    print("KERNEL_OK")
</pallas_src>

<mosaic_0001>
module attributes {stable_mosaic.version = 11 : i64} {
  func.func @_critic_kernel(%arg0: i32, %arg1: memref<128x4xf32, #tpu.memory_space<vmem>>, %arg2: memref<4x128xf32, #tpu.memory_space<vmem>>, %arg3: memref<1x128xf32, #tpu.memory_space<vmem>>, %arg4: memref<128x128xbf16, #tpu.memory_space<vmem>>, %arg5: memref<128x1xf32, #tpu.memory_space<vmem>>, %arg6: memref<128x1xf32, #tpu.memory_space<vmem>>, %arg7: memref<1x1xf32, #tpu.memory_space<vmem>>, %arg8: memref<1x128xf32, #tpu.memory_space<vmem>>) attributes {dimension_semantics = [#tpu.dimension_semantics<parallel>], iteration_bounds = array<i64: 2>, scalar_prefetch = 0 : i64, scratch_operands = 0 : i64, tpu.core_type = #tpu.core_type<tc>, window_params = [{transform_indices = @transform_0, window_bounds = array<i64: 128, 4>}, {pipeline_mode = #tpu.pipeline_mode<synchronous>, transform_indices = @transform_1, window_bounds = array<i64: 4, 128>}, {pipeline_mode = #tpu.pipeline_mode<synchronous>, transform_indices = @transform_2, window_bounds = array<i64: 1, 128>}, {pipeline_mode = #tpu.pipeline_mode<synchronous>, transform_indices = @transform_3, window_bounds = array<i64: 128, 128>}, {pipeline_mode = #tpu.pipeline_mode<synchronous>, transform_indices = @transform_4, window_bounds = array<i64: 128, 1>}, {pipeline_mode = #tpu.pipeline_mode<synchronous>, transform_indices = @transform_5, window_bounds = array<i64: 128, 1>}, {pipeline_mode = #tpu.pipeline_mode<synchronous>, transform_indices = @transform_6, window_bounds = array<i64: 1, 1>}, {transform_indices = @transform_7, window_bounds = array<i64: 1, 128>}]} {
    %c0 = arith.constant 0 : index
    %c0_0 = arith.constant 0 : index
    %0 = vector.load %arg1[%c0, %c0_0] : memref<128x4xf32, #tpu.memory_space<vmem>>, vector<128x4xf32>
    %c0_1 = arith.constant 0 : index
    %c0_2 = arith.constant 0 : index
    %1 = vector.load %arg2[%c0_1, %c0_2] : memref<4x128xf32, #tpu.memory_space<vmem>>, vector<4x128xf32>
    %2 = vector.extract_strided_slice %0 {offsets = [0, 0], sizes = [128, 1], strides = [1, 1]} : vector<128x4xf32> to vector<128x1xf32>
    %3 = vector.extract_strided_slice %1 {offsets = [0, 0], sizes = [1, 128], strides = [1, 1]} : vector<4x128xf32> to vector<1x128xf32>
    %4 = vector.broadcast %2 : vector<128x1xf32> to vector<128x128xf32>
    %5 = vector.broadcast %3 : vector<1x128xf32> to vector<128x128xf32>
    %6 = arith.mulf %4, %5 : vector<128x128xf32>
    %c0_3 = arith.constant 0 : index
    %c0_4 = arith.constant 0 : index
    %7 = vector.load %arg3[%c0_3, %c0_4] : memref<1x128xf32, #tpu.memory_space<vmem>>, vector<1x128xf32>
    %8 = vector.broadcast %7 : vector<1x128xf32> to vector<128x128xf32>
    %9 = arith.addf %6, %8 : vector<128x128xf32>
    %10 = vector.extract_strided_slice %0 {offsets = [0, 1], sizes = [128, 1], strides = [1, 1]} : vector<128x4xf32> to vector<128x1xf32>
    %11 = vector.extract_strided_slice %1 {offsets = [1, 0], sizes = [1, 128], strides = [1, 1]} : vector<4x128xf32> to vector<1x128xf32>
    %12 = vector.broadcast %10 : vector<128x1xf32> to vector<128x128xf32>
    %13 = vector.broadcast %11 : vector<1x128xf32> to vector<128x128xf32>
    %14 = arith.mulf %12, %13 : vector<128x128xf32>
    %15 = arith.addf %9, %14 : vector<128x128xf32>
    %16 = vector.extract_strided_slice %0 {offsets = [0, 2], sizes = [128, 1], strides = [1, 1]} : vector<128x4xf32> to vector<128x1xf32>
    %17 = vector.extract_strided_slice %1 {offsets = [2, 0], sizes = [1, 128], strides = [1, 1]} : vector<4x128xf32> to vector<1x128xf32>
    %18 = vector.broadcast %16 : vector<128x1xf32> to vector<128x128xf32>
    %19 = vector.broadcast %17 : vector<1x128xf32> to vector<128x128xf32>
    %20 = arith.mulf %18, %19 : vector<128x128xf32>
    %21 = arith.addf %15, %20 : vector<128x128xf32>
    %22 = vector.extract_strided_slice %0 {offsets = [0, 3], sizes = [128, 1], strides = [1, 1]} : vector<128x4xf32> to vector<128x1xf32>
    %23 = vector.extract_strided_slice %1 {offsets = [3, 0], sizes = [1, 128], strides = [1, 1]} : vector<4x128xf32> to vector<1x128xf32>
    %24 = vector.broadcast %22 : vector<128x1xf32> to vector<128x128xf32>
    %25 = vector.broadcast %23 : vector<1x128xf32> to vector<128x128xf32>
    %26 = arith.mulf %24, %25 : vector<128x128xf32>
    %27 = arith.addf %21, %26 : vector<128x128xf32>
    %28 = math.tanh %27 : vector<128x128xf32>
    %29 = tpu.transpose %28, [1, 0] : vector<128x128xf32> -> vector<128x128xf32>
    %c0_5 = arith.constant 0 : index
    %c0_6 = arith.constant 0 : index
    %30 = vector.load %arg4[%c0_5, %c0_6] : memref<128x128xbf16, #tpu.memory_space<vmem>>, vector<128x128xbf16>
    %31 = arith.truncf %29 : vector<128x128xf32> to vector<128x128xbf16>
    %cst = arith.constant dense<0.000000e+00> : vector<128x128xf32>
    %32 = tpu.matmul %30, %31, %cst {dimension_numbers = #tpu.dot_dimension_numbers<[1], [0], [0], [1], [0, 0, 1, 1], [], []>} : vector<128x128xbf16>, vector<128x128xbf16>, vector<128x128xf32> -> vector<128x128xf32>
    %c0_7 = arith.constant 0 : index
    %c0_8 = arith.constant 0 : index
    %33 = vector.load %arg5[%c0_7, %c0_8] : memref<128x1xf32, #tpu.memory_space<vmem>>, vector<128x1xf32>
    %34 = vector.broadcast %33 : vector<128x1xf32> to vector<128x128xf32>
    %35 = arith.addf %32, %34 : vector<128x128xf32>
    %36 = math.tanh %35 : vector<128x128xf32>
    %c0_9 = arith.constant 0 : index
    %c0_10 = arith.constant 0 : index
    %37 = vector.load %arg6[%c0_9, %c0_10] : memref<128x1xf32, #tpu.memory_space<vmem>>, vector<128x1xf32>
    %38 = vector.broadcast %37 : vector<128x1xf32> to vector<128x128xf32>
    %39 = arith.mulf %36, %38 : vector<128x128xf32>
    %cst_11 = arith.constant dense<0.000000e+00> : vector<128xf32>
    %40 = vector.multi_reduction <add>, %39, %cst_11 [0] : vector<128x128xf32> to vector<128xf32>
    %41 = vector.shape_cast %40 : vector<128xf32> to vector<1x128xf32>
    %c0_12 = arith.constant 0 : index
    %c0_13 = arith.constant 0 : index
    %42 = vector.load %arg7[%c0_12, %c0_13] : memref<1x1xf32, #tpu.memory_space<vmem>>, vector<1x1xf32>
    %43 = vector.broadcast %42 : vector<1x1xf32> to vector<1x128xf32>
    %44 = arith.addf %41, %43 : vector<1x128xf32>
    %c0_14 = arith.constant 0 : index
    %c0_15 = arith.constant 0 : index
    %45 = vector.load %arg8[%c0_14, %c0_15] : memref<1x128xf32, #tpu.memory_space<vmem>>, vector<1x128xf32>
    tpu.vector_store %arg8[%c0_14, %c0_15], %44 {strides = array<i32>} : memref<1x128xf32, #tpu.memory_space<vmem>>, vector<1x128xf32>,
    return
  }
  func.func @transform_0(%arg0: i32) -> (i32, i32) {
    %c0_i32 = arith.constant 0 : i32
    %c0_i32_0 = arith.constant 0 : i32
    return %arg0, %c0_i32 : i32, i32
  }
  func.func @transform_1(%arg0: i32) -> (i32, i32) {
    %c0_i32 = arith.constant 0 : i32
    %c0_i32_0 = arith.constant 0 : i32
    %c0_i32_1 = arith.constant 0 : i32
    return %c0_i32, %c0_i32_0 : i32, i32
  }
  func.func @transform_2(%arg0: i32) -> (i32, i32) {
    %c0_i32 = arith.constant 0 : i32
    %c0_i32_0 = arith.constant 0 : i32
    %c0_i32_1 = arith.constant 0 : i32
    return %c0_i32, %c0_i32_0 : i32, i32
  }
  func.func @transform_3(%arg0: i32) -> (i32, i32) {
    %c0_i32 = arith.constant 0 : i32
    %c0_i32_0 = arith.constant 0 : i32
    %c0_i32_1 = arith.constant 0 : i32
    return %c0_i32, %c0_i32_0 : i32, i32
  }
  func.func @transform_4(%arg0: i32) -> (i32, i32) {
    %c0_i32 = arith.constant 0 : i32
    %c0_i32_0 = arith.constant 0 : i32
    %c0_i32_1 = arith.constant 0 : i32
    return %c0_i32, %c0_i32_0 : i32, i32
  }
  func.func @transform_5(%arg0: i32) -> (i32, i32) {
    %c0_i32 = arith.constant 0 : i32
    %c0_i32_0 = arith.constant 0 : i32
    %c0_i32_1 = arith.constant 0 : i32
    return %c0_i32, %c0_i32_0 : i32, i32
  }
  func.func @transform_6(%arg0: i32) -> (i32, i32) {
    %c0_i32 = arith.constant 0 : i32
    %c0_i32_0 = arith.constant 0 : i32
    %c0_i32_1 = arith.constant 0 : i32
    return %c0_i32, %c0_i32_0 : i32, i32
  }
  func.func @transform_7(%arg0: i32) -> (i32, i32) {
    %c0_i32 = arith.constant 0 : i32
    %c0_i32_0 = arith.constant 0 : i32
    return %c0_i32, %arg0 : i32, i32
  }
}

</mosaic_0001>

<llo_original>
// kernel: tpu_custom_call.1
$region0: #{tpu_custom_call.1}
  #allocation0 [shape = 'u32[]', space=smem, size = 0x4, offset = 0x4, fixed_abs, tag = 'smem constant byte address 0x4 - core index']
  #allocation1 [shape = 'u32[144,128]{1,0:T(1,128)}', space=vmem, size = 0x12000, scoped, tag = 'internal scratch']
  #allocation2 [shape = 'f32[1,1]{1,0:T(1,128)S(1)}', space=vmem, size = 0x200, scoped, tag = 'scoped memory for tpu_custom_call.1']
  %s0 = inlined_call_operand.vmem [shape: f32[256,4], index: 0, kind: input, shape index: {}]
  %s1 = inlined_call_operand.vmem [shape: f32[4,128], index: 1, kind: input, shape index: {}]
  %s2 = inlined_call_operand.vmem [shape: f32[1,128], index: 2, kind: input, shape index: {}]
  %s3 = inlined_call_operand.vmem [shape: bf16[128,128], index: 3, kind: input, shape index: {}]
  %s4 = inlined_call_operand.vmem [shape: f32[128,1], index: 4, kind: input, shape index: {}]
  %s5 = inlined_call_operand.vmem [shape: f32[128,1], index: 5, kind: input, shape index: {}]
  %s6 = inlined_call_operand.<no memory space> [shape: f32[1,1], index: 6, kind: input, shape index: {}]
  %s7 = inlined_call_operand.hbm [shape: f32[1,256], index: 7, kind: output, shape index: {}]
  %s8 = sld [smem:[#allocation0]]
  $region61: #{tpu_custom_call.1} parent=0
    _
  %s10 = ssub.s32 1, %s8
  %s11 = scalar_select 0, %s10, %s8
  %v12 = vstv %s6
  %13 = vst [vmem:[#allocation2] sm:$0x1] %v12
  $region1: #{tpu_custom_call.1} parent=0
    #allocation3 [shape = 'u8[1024]{0}', space=vmem, size = 0x400, scoped, tag = 'output window, operand 0']
    #allocation4 [shape = 's32[2]{0}', space=sflag, size = 0x8, scoped, tag = 'scoped memory for tpu_custom_call.1']
    %14 = vsyncpa [#allocation4], 0
    %s15 = scalar_lea.sflag [#allocation4], 1
    %16 = vsyncpa %s15, 0
    loop: start=0, step=1, limit=4
    $region2: #{tpu_custom_call.1} parent=1 // loop_pre_header
      _
    $region3: #{tpu_custom_call.1} parent=1 // loop_header
      %s18 = sphi 0, %s22
      %p19 = scmp.ge.s32.totalorder %s18, 4
      %s28 = sphi 0, %s30
      %s31 = sphi 0, %s28
      %s32 = sphi 0, %s31
      %s48 = sphi 0, %s32
      %s52 = sphi 0, %s52
      %s54 = sphi 0, %s52
      %s55 = sphi 0, %s54
      %s69 = sphi 0, %s55
      %s73 = sphi 0, %s73
      %s75 = sphi 0, %s73
      %s76 = sphi 0, %s75
      %s90 = sphi 0, %s76
      %s94 = sphi 0, %s94
      %s96 = sphi 0, %s94
      %s97 = sphi 0, %s96
      %s111 = sphi 0, %s97
      %s115 = sphi 0, %s115
      %s117 = sphi 0, %s115
      %s118 = sphi 0, %s117
      %s132 = sphi 0, %s118
      %s136 = sphi 0, %s136
      %s138 = sphi 0, %s136
      %s139 = sphi 0, %s138
      %s153 = sphi 0, %s139
      %s157 = sphi 0, %s157
      %s159 = sphi 0, %s157
      %s160 = sphi 0, %s159
      %s174 = sphi 0, %s160
      %s180 = sphi 0, %s182
      %s183 = sphi 0, %s180
      %s184 = sphi 0, %s183
      %s200 = sphi 0, %s184
    $region4: #{tpu_custom_call.1} parent=1 // loop_header_branch
      %21 = sbr.rel (%p19) target = $region8
    $region5: #{tpu_custom_call.1} parent=1 // loop_body
      %s23 = ssub.s32 %s18, 1
      %s24 = ssub.s32 %s18, 2
      %s25 = sadd.s32 %s18, 1
      %s26 = ssub.s32 %s18, %s25
      %p27 = scmp.eq.s32.totalorder %s26, 0
      %s29 = sadd.s32 %s28, 1
      %s30 = scalar_select %p27, %s28, %s29
      %p33 = pneg %p27
      %p34 = scmp.eq.s32.totalorder %s18, 1
      %p35 = por %p33, %p34
      %p36 = scmp.ne.s32.totalorder %s28, %s31
      %p37 = scmp.eq.s32.totalorder %s18, 0
      %p38 = por %p36, %p37
      %p39 = scmp.ne.s32.totalorder %s28, %s31
      %p40 = scmp.eq.s32.totalorder %s23, 1
      %p41 = por %p39, %p40
      %p42 = scmp.ne.s32.totalorder %s31, %s32
      %p43 = scmp.eq.s32.totalorder %s23, 0
      %p44 = por %p42, %p43
      %p45 = scmp.ne.s32.totalorder %s31, %s32
      %p46 = scmp.eq.s32.totalorder %s24, 1
      %p47 = por %p45, %p46
      %p49 = scmp.ne.s32.totalorder %s32, %s48
      %p50 = scmp.eq.s32.totalorder %s24, 0
      %p51 = por %p49, %p50
      %s53 = sadd.s32 %s52, 1
      %p56 = scmp.eq.s32.totalorder %s18, 1
      %p57 = scmp.ne.s32.totalorder %s52, %s54
      %p58 = scmp.eq.s32.totalorder %s18, 0
      %p59 = por %p57, %p58
      %p60 = scmp.ne.s32.totalorder %s52, %s54
      %p61 = scmp.eq.s32.totalorder %s23, 1
      %p62 = por %p60, %p61
      %p63 = scmp.ne.s32.totalorder %s54, %s55
      %p64 = scmp.eq.s32.totalorder %s23, 0
      %p65 = por %p63, %p64
      %p66 = scmp.ne.s32.totalorder %s54, %s55
      %p67 = scmp.eq.s32.totalorder %s24, 1
      %p68 = por %p66, %p67
      %p70 = scmp.ne.s32.totalorder %s55, %s69
      %p71 = scmp.eq.s32.totalorder %s24, 0
      %p72 = por %p70, %p71
      %s74 = sadd.s32 %s73, 1
      %p77 = scmp.eq.s32.totalorder %s18, 1
      %p78 = scmp.ne.s32.totalorder %s73, %s75
      %p79 = scmp.eq.s32.totalorder %s18, 0
      %p80 = por %p78, %p79
      %p81 = scmp.ne.s32.totalorder %s73, %s75
      %p82 = scmp.eq.s32.totalorder %s23, 1
      %p83 = por %p81, %p82
      %p84 = scmp.ne.s32.totalorder %s75, %s76
      %p85 = scmp.eq.s32.totalorder %s23, 0
      %p86 = por %p84, %p85
      %p87 = scmp.ne.s32.totalorder %s75, %s76
      %p88 = scmp.eq.s32.totalorder %s24, 1
      %p89 = por %p87, %p88
      %p91 = scmp.ne.s32.totalorder %s76, %s90
      %p92 = scmp.eq.s32.totalorder %s24, 0
      %p93 = por %p91, %p92
      %s95 = sadd.s32 %s94, 1
      %p98 = scmp.eq.s32.totalorder %s18, 1
      %p99 = scmp.ne.s32.totalorder %s94, %s96
      %p100 = scmp.eq.s32.totalorder %s18, 0
      %p101 = por %p99, %p100
      %p102 = scmp.ne.s32.totalorder %s94, %s96
      %p103 = scmp.eq.s32.totalorder %s23, 1
      %p104 = por %p102, %p103
      %p105 = scmp.ne.s32.totalorder %s96, %s97
      %p106 = scmp.eq.s32.totalorder %s23, 0
      %p107 = por %p105, %p106
      %p108 = scmp.ne.s32.totalorder %s96, %s97
      %p109 = scmp.eq.s32.totalorder %s24, 1
      %p110 = por %p108, %p109
      %p112 = scmp.ne.s32.totalorder %s97, %s111
      %p113 = scmp.eq.s32.totalorder %s24, 0
      %p114 = por %p112, %p113
      %s116 = sadd.s32 %s115, 1
      %p119 = scmp.eq.s32.totalorder %s18, 1
      %p120 = scmp.ne.s32.totalorder %s115, %s117
      %p121 = scmp.eq.s32.totalorder %s18, 0
      %p122 = por %p120, %p121
      %p123 = scmp.ne.s32.totalorder %s115, %s117
      %p124 = scmp.eq.s32.totalorder %s23, 1
      %p125 = por %p123, %p124
      %p126 = scmp.ne.s32.totalorder %s117, %s118
      %p127 = scmp.eq.s32.totalorder %s23, 0
      %p128 = por %p126, %p127
      %p129 = scmp.ne.s32.totalorder %s117, %s118
      %p130 = scmp.eq.s32.totalorder %s24, 1
      %p131 = por %p129, %p130
      %p133 = scmp.ne.s32.totalorder %s118, %s132
      %p134 = scmp.eq.s32.totalorder %s24, 0
      %p135 = por %p133, %p134
      %s137 = sadd.s32 %s136, 1
      %p140 = scmp.eq.s32.totalorder %s18, 1
      %p141 = scmp.ne.s32.totalorder %s136, %s138
      %p142 = scmp.eq.s32.totalorder %s18, 0
      %p143 = por %p141, %p142
      %p144 = scmp.ne.s32.totalorder %s136, %s138
      %p145 = scmp.eq.s32.totalorder %s23, 1
      %p146 = por %p144, %p145
      %p147 = scmp.ne.s32.totalorder %s138, %s139
      %p148 = scmp.eq.s32.totalorder %s23, 0
      %p149 = por %p147, %p148
      %p150 = scmp.ne.s32.totalorder %s138, %s139
      %p151 = scmp.eq.s32.totalorder %s24, 1
      %p152 = por %p150, %p151
      %p154 = scmp.ne.s32.totalorder %s139, %s153
      %p155 = scmp.eq.s32.totalorder %s24, 0
      %p156 = por %p154, %p155
      %s158 = sadd.s32 %s157, 1
      %p161 = scmp.eq.s32.totalorder %s18, 1
      %p162 = scmp.ne.s32.totalorder %s157, %s159
      %p163 = scmp.eq.s32.totalorder %s18, 0
      %p164 = por %p162, %p163
      %p165 = scmp.ne.s32.totalorder %s157, %s159
      %p166 = scmp.eq.s32.totalorder %s23, 1
      %p167 = por %p165, %p166
      %p168 = scmp.ne.s32.totalorder %s159, %s160
      %p169 = scmp.eq.s32.totalorder %s23, 0
      %p170 = por %p168, %p169
      %p171 = scmp.ne.s32.totalorder %s159, %s160
      %p172 = scmp.eq.s32.totalorder %s24, 1
      %p173 = por %p171, %p172
      %p175 = scmp.ne.s32.totalorder %s160, %s174
      %p176 = scmp.eq.s32.totalorder %s24, 0
      %p177 = por %p175, %p176
      %s178 = ssub.s32 %s18, %s25
      %p179 = scmp.eq.s32.totalorder %s178, 0
      %s181 = sadd.s32 %s180, 1
      %s182 = scalar_select %p179, %s180, %s181
      %p185 = pneg %p179
      %p186 = scmp.eq.s32.totalorder %s18, 1
      %p187 = por %p185, %p186
      %p188 = scmp.ne.s32.totalorder %s180, %s183
      %p189 = scmp.eq.s32.totalorder %s18, 0
      %p190 = por %p188, %p189
      %p191 = scmp.ne.s32.totalorder %s180, %s183
      %p192 = scmp.eq.s32.totalorder %s23, 1
      %p193 = por %p191, %p192
      %p194 = scmp.ne.s32.totalorder %s183, %s184
      %p195 = scmp.eq.s32.totalorder %s23, 0
      %p196 = por %p194, %p195
      %p197 = scmp.ne.s32.totalorder %s183, %s184
      %p198 = scmp.eq.s32.totalorder %s24, 1
      %p199 = por %p197, %p198
      %p201 = scmp.ne.s32.totalorder %s184, %s200
      %p202 = scmp.eq.s32.totalorder %s24, 0
      %p203 = por %p201, %p202
      %p204 = scmp.le.s32.totalorder 1, %s18
      %p205 = scmp.lt.s32.totalorder %s18, 3
      %p206 = pnand %p204, %p205
      %p207 = pneg %p206
      // Predicated region
      $region9: #{tpu_custom_call.1} parent=5 // pred_check
        _
      $region10: #{tpu_custom_call.1} parent=5 // pred_check_branch
        %209 = sbr.rel (%p206) target = $region12
      $region11: #{tpu_custom_call.1} parent=5 // pred_region
        %s210 = ssub.s32 %s18, 1
        // Predicated region
        $region13: #{tpu_custom_call.1} parent=11 // pred_check
          %p211 = pneg %p65
        $region14: #{tpu_custom_call.1} parent=11 // pred_check_branch
          %213 = sbr.rel (%p211) target = $region16
        $region15: #{tpu_custom_call.1} parent=11 // pred_region
          _
        $region16: #{tpu_custom_call.1} parent=11 // pred_fallthru
          _
        // Predicated region
        $region17: #{tpu_custom_call.1} parent=11 // pred_check
          %p214 = pneg %p86
        $region18: #{tpu_custom_call.1} parent=11 // pred_check_branch
          %216 = sbr.rel (%p214) target = $region20
        $region19: #{tpu_custom_call.1} parent=11 // pred_region
          _
        $region20: #{tpu_custom_call.1} parent=11 // pred_fallthru
          _
        // Predicated region
        $region21: #{tpu_custom_call.1} parent=11 // pred_check
          %p217 = pneg %p107
        $region22: #{tpu_custom_call.1} parent=11 // pred_check_branch
          %219 = sbr.rel (%p217) target = $region24
        $region23: #{tpu_custom_call.1} parent=11 // pred_region
          _
        $region24: #{tpu_custom_call.1} parent=11 // pred_fallthru
          _
        // Predicated region
        $region25: #{tpu_custom_call.1} parent=11 // pred_check
          %p220 = pneg %p128
        $region26: #{tpu_custom_call.1} parent=11 // pred_check_branch
          %222 = sbr.rel (%p220) target = $region28
        $region27: #{tpu_custom_call.1} parent=11 // pred_region
          _
        $region28: #{tpu_custom_call.1} parent=11 // pred_fallthru
          _
        // Predicated region
        $region29: #{tpu_custom_call.1} parent=11 // pred_check
          %p223 = pneg %p149
        $region30: #{tpu_custom_call.1} parent=11 // pred_check_branch
          %225 = sbr.rel (%p223) target = $region32
        $region31: #{tpu_custom_call.1} parent=11 // pred_region
          _
        $region32: #{tpu_custom_call.1} parent=11 // pred_fallthru
          _
        // Predicated region
        $region33: #{tpu_custom_call.1} parent=11 // pred_check
          %p226 = pneg %p170
        $region34: #{tpu_custom_call.1} parent=11 // pred_check_branch
          %228 = sbr.rel (%p226) target = $region36
        $region35: #{tpu_custom_call.1} parent=11 // pred_region
          _
        $region36: #{tpu_custom_call.1} parent=11 // pred_fallthru
          _
      $region12: #{tpu_custom_call.1} parent=5 // pred_fallthru
        _
      %p229 = scmp.lt.s32.totalorder %s18, 2
      // Predicated region
      $region37: #{tpu_custom_call.1} parent=5 // pred_check
        %p230 = pneg %p229
      $region38: #{tpu_custom_call.1} parent=5 // pred_check_branch
        %232 = sbr.rel (%p230) target = $region40
      $region39: #{tpu_custom_call.1} parent=5 // pred_region
        // Predicated region
        $region41: #{tpu_custom_call.1} parent=39 // pred_check
          %p233 = pneg %p38
        $region42: #{tpu_custom_call.1} parent=39 // pred_check_branch
          %235 = sbr.rel (%p233) target = $region44
        $region43: #{tpu_custom_call.1} parent=39 // pred_region
          %s236 = smul.u32 16, %s18
          %p237 = scmp.lt.s32.totalorder %s236, 31
          %s238 = scalar_select %p237, %s236, 31
          %s239 = smul.addr %s238, 8
          %s240 = scalar_lea.vmem %s0, %s239
          %s241 = smul.u32 16, %s18
        $region44: #{tpu_custom_call.1} parent=39 // pred_fallthru
          _
      $region40: #{tpu_custom_call.1} parent=5 // pred_fallthru
        _
      %p242 = scmp.le.s32.totalorder 1, %s18
      %p243 = scmp.lt.s32.totalorder %s18, 3
      %p244 = pnand %p242, %p243
      %p245 = pneg %p244
      // Predicated region
      $region45: #{tpu_custom_call.1} parent=5 // pred_check
        _
      $region46: #{tpu_custom_call.1} parent=5 // pred_check_branch
        %247 = sbr.rel (%p244) target = $region48
      $region47: #{tpu_custom_call.1} parent=5 // pred_region
        %s248 = ssub.s32 %s18, 1
        %s249 = smul.u32 16, %s23
        %p250 = scmp.lt.s32.totalorder %s249, 31
        %s251 = scalar_select %p250, %s249, 31
        %s252 = smul.addr %s251, 8
        %s253 = scalar_lea.vmem %s0, %s252
        %p254 = pneg %p44
        %p255 = pneg %p41
        %p256 = pneg %p65
        %p257 = pneg %p62
        %p258 = pneg %p86
        %p259 = pneg %p83
        %p260 = pneg %p107
        %p261 = pneg %p104
        %p262 = pneg %p128
        %p263 = pneg %p125
        %p264 = pneg %p149
        %p265 = pneg %p146
        %p266 = pneg %p170
        %p267 = pneg %p167
        %p268 = pneg %p196
        %p269 = pneg %p193
        %s270 = sand.u32 %s183, 1
        %s271 = scalar_lea.sflag [#allocation4], %s270
        %s272 = sand.u32 %s183, 1
        %s273 = scalar_lea.vmem [#allocation3], %s272
        %s274 = smul.u32 16, %s23
        %p275 = scmp.lt.s32.totalorder %s274, 31
        %s276 = scalar_select %p275, %s274, 31
        %s277 = smul.addr %s276, 8
        %s278 = scalar_lea.vmem %s0, %s277
        %s279 = smul.u32 16, %s23
        %v281 = vld [vmem:[%s278] sm:$0xff]
        %v282 = vld [vmem:[%s278 + $0x8] sm:$0xff]
        %v283 = vld [vmem:[%s278 + $0x10] sm:$0xff]
        %v284 = vld [vmem:[%s278 + $0x18] sm:$0xff]
        %v285 = vld [vmem:[%s278 + $0x20] sm:$0xff]
        %v286 = vld [vmem:[%s278 + $0x28] sm:$0xff]
        %v287 = vld [vmem:[%s278 + $0x30] sm:$0xff]
        %v288 = vld [vmem:[%s278 + $0x38] sm:$0xff]
        %v289 = vld [vmem:[%s278 + $0x40] sm:$0xff]
        %v290 = vld [vmem:[%s278 + $0x48] sm:$0xff]
        %v291 = vld [vmem:[%s278 + $0x50] sm:$0xff]
        %v292 = vld [vmem:[%s278 + $0x58] sm:$0xff]
        %v293 = vld [vmem:[%s278 + $0x60] sm:$0xff]
        %v294 = vld [vmem:[%s278 + $0x68] sm:$0xff]
        %v295 = vld [vmem:[%s278 + $0x70] sm:$0xff]
        %v296 = vld [vmem:[%s278 + $0x78] sm:$0xff]
        %v297 = vld [vmem:[%s1] sm:$0xf]
        %299 = vset.pattern.permute.xlu0 0
        %300 = vperm.xlu0 %299, %v281
        %v301 = vpop.permute.xlu0 %300
        %304 = vset.pattern.permute.xlu0 0
        %305 = vperm.xlu0 %304, %v282
        %v306 = vpop.permute.xlu0 %305
        %309 = vset.pattern.permute.xlu0 0
        %310 = vperm.xlu0 %309, %v283
        %v311 = vpop.permute.xlu0 %310
        %314 = vset.pattern.permute.xlu0 0
        %315 = vperm.xlu0 %314, %v284
        %v316 = vpop.permute.xlu0 %315
        %319 = vset.pattern.permute.xlu0 0
        %320 = vperm.xlu0 %319, %v285
        %v321 = vpop.permute.xlu0 %320
        %324 = vset.pattern.permute.xlu0 0
        %325 = vperm.xlu0 %324, %v286
        %v326 = vpop.permute.xlu0 %325
        %329 = vset.pattern.permute.xlu0 0
        %330 = vperm.xlu0 %329, %v287
        %v331 = vpop.permute.xlu0 %330
        %334 = vset.pattern.permute.xlu0 0
        %335 = vperm.xlu0 %334, %v288
        %v336 = vpop.permute.xlu0 %335
        %339 = vset.pattern.permute.xlu0 0
        %340 = vperm.xlu0 %339, %v289
        %v341 = vpop.permute.xlu0 %340
        %344 = vset.pattern.permute.xlu0 0
        %345 = vperm.xlu0 %344, %v290
        %v346 = vpop.permute.xlu0 %345
        %349 = vset.pattern.permute.xlu0 0
        %350 = vperm.xlu0 %349, %v291
        %v351 = vpop.permute.xlu0 %350
        %354 = vset.pattern.permute.xlu0 0
        %355 = vperm.xlu0 %354, %v292
        %v356 = vpop.permute.xlu0 %355
        %359 = vset.pattern.permute.xlu0 0
        %360 = vperm.xlu0 %359, %v293
        %v361 = vpop.permute.xlu0 %360
        %364 = vset.pattern.permute.xlu0 0
        %365 = vperm.xlu0 %364, %v294
        %v366 = vpop.permute.xlu0 %365
        %369 = vset.pattern.permute.xlu0 0
        %370 = vperm.xlu0 %369, %v295
        %v371 = vpop.permute.xlu0 %370
        %374 = vset.pattern.permute.xlu0 0
        %375 = vperm.xlu0 %374, %v296
        %v376 = vpop.permute.xlu0 %375
        %v378 = vlaneseq
        %v379 = vshrl.u32 %v378, 7
        %v380 = vsub.s32 0, %v379
        %v381 = vrot.slane %v297, %v380
        %v382 = vmul.f32 %v301, %v381
        %v383 = vmul.f32 %v306, %v381
        %v384 = vmul.f32 %v311, %v381
        %v385 = vmul.f32 %v316, %v381
        %v386 = vmul.f32 %v321, %v381
        %v387 = vmul.f32 %v326, %v381
        %v388 = vmul.f32 %v331, %v381
        %v389 = vmul.f32 %v336, %v381
        %v390 = vmul.f32 %v341, %v381
        %v391 = vmul.f32 %v346, %v381
        %v392 = vmul.f32 %v351, %v381
        %v393 = vmul.f32 %v356, %v381
        %v394 = vmul.f32 %v361, %v381
        %v395 = vmul.f32 %v366, %v381
        %v396 = vmul.f32 %v371, %v381
        %v397 = vmul.f32 %v376, %v381
        %v398 = vld [vmem:[%s2] sm:$0x1]
        %v400 = vlaneseq
        %v401 = vshrl.u32 %v400, 7
        %v402 = vsub.s32 0, %v401
        %v403 = vrot.slane %v398, %v402
        %v405 = vadd.f32 %v382, %v403
        %v406 = vadd.f32 %v383, %v403
        %v407 = vadd.f32 %v384, %v403
        %v408 = vadd.f32 %v385, %v403
        %v409 = vadd.f32 %v386, %v403
        %v410 = vadd.f32 %v387, %v403
        %v411 = vadd.f32 %v388, %v403
        %v412 = vadd.f32 %v389, %v403
        %v413 = vadd.f32 %v390, %v403
        %v414 = vadd.f32 %v391, %v403
        %v415 = vadd.f32 %v392, %v403
        %v416 = vadd.f32 %v393, %v403
        %v417 = vadd.f32 %v394, %v403
        %v418 = vadd.f32 %v395, %v403
        %v419 = vadd.f32 %v396, %v403
        %v420 = vadd.f32 %v397, %v403
        %421 = vset.pattern.permute.xlu0 1
        %422 = vperm.xlu0 %421, %v281
        %v423 = vpop.permute.xlu0 %422
        %425 = vset.pattern.permute.xlu0 1
        %426 = vperm.xlu0 %425, %v282
        %v427 = vpop.permute.xlu0 %426
        %429 = vset.pattern.permute.xlu0 1
        %430 = vperm.xlu0 %429, %v283
        %v431 = vpop.permute.xlu0 %430
        %433 = vset.pattern.permute.xlu0 1
        %434 = vperm.xlu0 %433, %v284
        %v435 = vpop.permute.xlu0 %434
        %437 = vset.pattern.permute.xlu0 1
        %438 = vperm.xlu0 %437, %v285
        %v439 = vpop.permute.xlu0 %438
        %441 = vset.pattern.permute.xlu0 1
        %442 = vperm.xlu0 %441, %v286
        %v443 = vpop.permute.xlu0 %442
        %445 = vset.pattern.permute.xlu0 1
        %446 = vperm.xlu0 %445, %v287
        %v447 = vpop.permute.xlu0 %446
        %449 = vset.pattern.permute.xlu0 1
        %450 = vperm.xlu0 %449, %v288
        %v451 = vpop.permute.xlu0 %450
        %453 = vset.pattern.permute.xlu0 1
        %454 = vperm.xlu0 %453, %v289
        %v455 = vpop.permute.xlu0 %454
        %457 = vset.pattern.permute.xlu0 1
        %458 = vperm.xlu0 %457, %v290
        %v459 = vpop.permute.xlu0 %458
        %461 = vset.pattern.permute.xlu0 1
        %462 = vperm.xlu0 %461, %v291
        %v463 = vpop.permute.xlu0 %462
        %465 = vset.pattern.permute.xlu0 1
        %466 = vperm.xlu0 %465, %v292
        %v467 = vpop.permute.xlu0 %466
        %469 = vset.pattern.permute.xlu0 1
        %470 = vperm.xlu0 %469, %v293
        %v471 = vpop.permute.xlu0 %470
        %473 = vset.pattern.permute.xlu0 1
        %474 = vperm.xlu0 %473, %v294
        %v475 = vpop.permute.xlu0 %474
        %477 = vset.pattern.permute.xlu0 1
        %478 = vperm.xlu0 %477, %v295
        %v479 = vpop.permute.xlu0 %478
        %481 = vset.pattern.permute.xlu0 1
        %482 = vperm.xlu0 %481, %v296
        %v483 = vpop.permute.xlu0 %482
        %v485 = vlaneseq
        %v486 = vshrl.u32 %v485, 7
        %v487 = vsub.s32 1, %v486
        %v488 = vrot.slane %v297, %v487
        %v489 = vmul.f32 %v423, %v488
        %v490 = vmul.f32 %v427, %v488
        %v491 = vmul.f32 %v431, %v488
        %v492 = vmul.f32 %v435, %v488
        %v493 = vmul.f32 %v439, %v488
        %v494 = vmul.f32 %v443, %v488
        %v495 = vmul.f32 %v447, %v488
        %v496 = vmul.f32 %v451, %v488
        %v497 = vmul.f32 %v455, %v488
        %v498 = vmul.f32 %v459, %v488
        %v499 = vmul.f32 %v463, %v488
        %v500 = vmul.f32 %v467, %v488
        %v501 = vmul.f32 %v471, %v488
        %v502 = vmul.f32 %v475, %v488
        %v503 = vmul.f32 %v479, %v488
        %v504 = vmul.f32 %v483, %v488
        %v505 = vadd.f32 %v405, %v489
        %v506 = vadd.f32 %v406, %v490
        %v507 = vadd.f32 %v407, %v491
        %v508 = vadd.f32 %v408, %v492
        %v509 = vadd.f32 %v409, %v493
        %v510 = vadd.f32 %v410, %v494
        %v511 = vadd.f32 %v411, %v495
        %v512 = vadd.f32 %v412, %v496
        %v513 = vadd.f32 %v413, %v497
        %v514 = vadd.f32 %v414, %v498
        %v515 = vadd.f32 %v415, %v499
        %v516 = vadd.f32 %v416, %v500
        %v517 = vadd.f32 %v417, %v501
        %v518 = vadd.f32 %v418, %v502
        %v519 = vadd.f32 %v419, %v503
        %v520 = vadd.f32 %v420, %v504
        %521 = vset.pattern.permute.xlu0 2
        %522 = vperm.xlu0 %521, %v281
        %v523 = vpop.permute.xlu0 %522
        %525 = vset.pattern.permute.xlu0 2
        %526 = vperm.xlu0 %525, %v282
        %v527 = vpop.permute.xlu0 %526
        %529 = vset.pattern.permute.xlu0 2
        %530 = vperm.xlu0 %529, %v283
        %v531 = vpop.permute.xlu0 %530
        %533 = vset.pattern.permute.xlu0 2
        %534 = vperm.xlu0 %533, %v284
        %v535 = vpop.permute.xlu0 %534
        %537 = vset.pattern.permute.xlu0 2
        %538 = vperm.xlu0 %537, %v285
        %v539 = vpop.permute.xlu0 %538
        %541 = vset.pattern.permute.xlu0 2
        %542 = vperm.xlu0 %541, %v286
        %v543 = vpop.permute.xlu0 %542
        %545 = vset.pattern.permute.xlu0 2
        %546 = vperm.xlu0 %545, %v287
        %v547 = vpop.permute.xlu0 %546
        %549 = vset.pattern.permute.xlu0 2
        %550 = vperm.xlu0 %549, %v288
        %v551 = vpop.permute.xlu0 %550
        %553 = vset.pattern.permute.xlu0 2
        %554 = vperm.xlu0 %553, %v289
        %v555 = vpop.permute.xlu0 %554
        %557 = vset.pattern.permute.xlu0 2
        %558 = vperm.xlu0 %557, %v290
        %v559 = vpop.permute.xlu0 %558
        %561 = vset.pattern.permute.xlu0 2
        %562 = vperm.xlu0 %561, %v291
        %v563 = vpop.permute.xlu0 %562
        %565 = vset.pattern.permute.xlu0 2
        %566 = vperm.xlu0 %565, %v292
        %v567 = vpop.permute.xlu0 %566
        %569 = vset.pattern.permute.xlu0 2
        %570 = vperm.xlu0 %569, %v293
        %v571 = vpop.permute.xlu0 %570
        %573 = vset.pattern.permute.xlu0 2
        %574 = vperm.xlu0 %573, %v294
        %v575 = vpop.permute.xlu0 %574
        %577 = vset.pattern.permute.xlu0 2
        %578 = vperm.xlu0 %577, %v295
        %v579 = vpop.permute.xlu0 %578
        %581 = vset.pattern.permute.xlu0 2
        %582 = vperm.xlu0 %581, %v296
        %v583 = vpop.permute.xlu0 %582
        %v585 = vlaneseq
        %v586 = vshrl.u32 %v585, 7
        %v587 = vsub.s32 2, %v586
        %v588 = vrot.slane %v297, %v587
        %v589 = vmul.f32 %v523, %v588
        %v590 = vmul.f32 %v527, %v588
        %v591 = vmul.f32 %v531, %v588
        %v592 = vmul.f32 %v535, %v588
        %v593 = vmul.f32 %v539, %v588
        %v594 = vmul.f32 %v543, %v588
        %v595 = vmul.f32 %v547, %v588
        %v596 = vmul.f32 %v551, %v588
        %v597 = vmul.f32 %v555, %v588
        %v598 = vmul.f32 %v559, %v588
        %v599 = vmul.f32 %v563, %v588
        %v600 = vmul.f32 %v567, %v588
        %v601 = vmul.f32 %v571, %v588
        %v602 = vmul.f32 %v575, %v588
        %v603 = vmul.f32 %v579, %v588
        %v604 = vmul.f32 %v583, %v588
        %v605 = vadd.f32 %v505, %v589
        %v606 = vadd.f32 %v506, %v590
        %v607 = vadd.f32 %v507, %v591
        %v608 = vadd.f32 %v508, %v592
        %v609 = vadd.f32 %v509, %v593
        %v610 = vadd.f32 %v510, %v594
        %v611 = vadd.f32 %v511, %v595
        %v612 = vadd.f32 %v512, %v596
        %v613 = vadd.f32 %v513, %v597
        %v614 = vadd.f32 %v514, %v598
        %v615 = vadd.f32 %v515, %v599
        %v616 = vadd.f32 %v516, %v600
        %v617 = vadd.f32 %v517, %v601
        %v618 = vadd.f32 %v518, %v602
        %v619 = vadd.f32 %v519, %v603
        %v620 = vadd.f32 %v520, %v604
        %621 = vset.pattern.permute.xlu0 3
        %622 = vperm.xlu0 %621, %v281
        %v623 = vpop.permute.xlu0 %622
        %625 = vset.pattern.permute.xlu0 3
        %626 = vperm.xlu0 %625, %v282
        %v627 = vpop.permute.xlu0 %626
        %629 = vset.pattern.permute.xlu0 3
        %630 = vperm.xlu0 %629, %v283
        %v631 = vpop.permute.xlu0 %630
        %633 = vset.pattern.permute.xlu0 3
        %634 = vperm.xlu0 %633, %v284
        %v635 = vpop.permute.xlu0 %634
        %637 = vset.pattern.permute.xlu0 3
        %638 = vperm.xlu0 %637, %v285
        %v639 = vpop.permute.xlu0 %638
        %641 = vset.pattern.permute.xlu0 3
        %642 = vperm.xlu0 %641, %v286
        %v643 = vpop.permute.xlu0 %642
        %645 = vset.pattern.permute.xlu0 3
        %646 = vperm.xlu0 %645, %v287
        %v647 = vpop.permute.xlu0 %646
        %649 = vset.pattern.permute.xlu0 3
        %650 = vperm.xlu0 %649, %v288
        %v651 = vpop.permute.xlu0 %650
        %653 = vset.pattern.permute.xlu0 3
        %654 = vperm.xlu0 %653, %v289
        %v655 = vpop.permute.xlu0 %654
        %657 = vset.pattern.permute.xlu0 3
        %658 = vperm.xlu0 %657, %v290
        %v659 = vpop.permute.xlu0 %658
        %661 = vset.pattern.permute.xlu0 3
        %662 = vperm.xlu0 %661, %v291
        %v663 = vpop.permute.xlu0 %662
        %665 = vset.pattern.permute.xlu0 3
        %666 = vperm.xlu0 %665, %v292
        %v667 = vpop.permute.xlu0 %666
        %669 = vset.pattern.permute.xlu0 3
        %670 = vperm.xlu0 %669, %v293
        %v671 = vpop.permute.xlu0 %670
        %673 = vset.pattern.permute.xlu0 3
        %674 = vperm.xlu0 %673, %v294
        %v675 = vpop.permute.xlu0 %674
        %677 = vset.pattern.permute.xlu0 3
        %678 = vperm.xlu0 %677, %v295
        %v679 = vpop.permute.xlu0 %678
        %681 = vset.pattern.permute.xlu0 3
        %682 = vperm.xlu0 %681, %v296
        %v683 = vpop.permute.xlu0 %682
        %v685 = vlaneseq
        %v686 = vshrl.u32 %v685, 7
        %v687 = vsub.s32 3, %v686
        %v688 = vrot.slane %v297, %v687
        %v689 = vmul.f32 %v623, %v688
        %v690 = vmul.f32 %v627, %v688
        %v691 = vmul.f32 %v631, %v688
        %v692 = vmul.f32 %v635, %v688
        %v693 = vmul.f32 %v639, %v688
        %v694 = vmul.f32 %v643, %v688
        %v695 = vmul.f32 %v647, %v688
        %v696 = vmul.f32 %v651, %v688
        %v697 = vmul.f32 %v655, %v688
        %v698 = vmul.f32 %v659, %v688
        %v699 = vmul.f32 %v663, %v688
        %v700 = vmul.f32 %v667, %v688
        %v701 = vmul.f32 %v671, %v688
        %v702 = vmul.f32 %v675, %v688
        %v703 = vmul.f32 %v679, %v688
        %v704 = vmul.f32 %v683, %v688
        %v705 = vadd.f32 %v605, %v689
        %v706 = vadd.f32 %v606, %v690
        %v707 = vadd.f32 %v607, %v691
        %v708 = vadd.f32 %v608, %v692
        %v709 = vadd.f32 %v609, %v693
        %v710 = vadd.f32 %v610, %v694
        %v711 = vadd.f32 %v611, %v695
        %v712 = vadd.f32 %v612, %v696
        %v713 = vadd.f32 %v613, %v697
        %v714 = vadd.f32 %v614, %v698
        %v715 = vadd.f32 %v615, %v699
        %v716 = vadd.f32 %v616, %v700
        %v717 = vadd.f32 %v617, %v701
        %v718 = vadd.f32 %v618, %v702
        %v719 = vadd.f32 %v619, %v703
        %v720 = vadd.f32 %v620, %v704
        %v721 = vtanh.pop %v705
        %v722 = vtanh.pop %v706
        %v723 = vtanh.pop %v707
        %v724 = vtanh.pop %v708
        %v725 = vtanh.pop %v709
        %v726 = vtanh.pop %v710
        %v727 = vtanh.pop %v711
        %v728 = vtanh.pop %v712
        %v729 = vtanh.pop %v713
        %v730 = vtanh.pop %v714
        %v731 = vtanh.pop %v715
        %v732 = vtanh.pop %v716
        %v733 = vtanh.pop %v717
        %v734 = vtanh.pop %v718
        %v735 = vtanh.pop %v719
        %v736 = vtanh.pop %v720
        %737 = vxpose.xlu0.b32.start [1/16] %v721, 128
        %738 = vxpose.xlu0.b32.cont [2/16] %v722, 128
        %739 = vxpose.xlu0.b32.cont [3/16] %v723, 128
        %740 = vxpose.xlu0.b32.cont [4/16] %v724, 128
        %741 = vxpose.xlu0.b32.cont [5/16] %v725, 128
        %742 = vxpose.xlu0.b32.cont [6/16] %v726, 128
        %743 = vxpose.xlu0.b32.cont [7/16] %v727, 128
        %744 = vxpose.xlu0.b32.cont [8/16] %v728, 128
        %745 = vxpose.xlu0.b32.cont [9/16] %v729, 128
        %746 = vxpose.xlu0.b32.cont [10/16] %v730, 128
        %747 = vxpose.xlu0.b32.cont [11/16] %v731, 128
        %748 = vxpose.xlu0.b32.cont [12/16] %v732, 128
        %749 = vxpose.xlu0.b32.cont [13/16] %v733, 128
        %750 = vxpose.xlu0.b32.cont [14/16] %v734, 128
        %751 = vxpose.xlu0.b32.cont [15/16] %v735, 128
        %752 = vxpose.xlu0.b32.end [16/16] %v736, 128
        %v753 = vpop.trf.xlu0
        %v754 = vpop.trf.xlu0
        %v755 = vpop.trf.xlu0
        %v756 = vpop.trf.xlu0
        %v757 = vpop.trf.xlu0
        %v758 = vpop.trf.xlu0
        %v759 = vpop.trf.xlu0
        %v760 = vpop.trf.xlu0
        %v761 = vpop.trf.xlu0
        %v762 = vpop.trf.xlu0
        %v763 = vpop.trf.xlu0
        %v764 = vpop.trf.xlu0
        %v765 = vpop.trf.xlu0
        %v766 = vpop.trf.xlu0
        %v767 = vpop.trf.xlu0
        %v768 = vpop.trf.xlu0
        %v769 = vld [vmem:[%s3] sm:$0xf]
        %v770 = vld [vmem:[%s3 + $0x4] sm:$0xf]
        %v771 = vld [vmem:[%s3 + $0x8] sm:$0xf]
        %v772 = vld [vmem:[%s3 + $0xc] sm:$0xf]
        %v773 = vld [vmem:[%s3 + $0x10] sm:$0xf]
        %v774 = vld [vmem:[%s3 + $0x14] sm:$0xf]
        %v775 = vld [vmem:[%s3 + $0x18] sm:$0xf]
        %v776 = vld [vmem:[%s3 + $0x1c] sm:$0xf]
        %v777 = vld [vmem:[%s3 + $0x20] sm:$0xf]
        %v778 = vld [vmem:[%s3 + $0x24] sm:$0xf]
        %v779 = vld [vmem:[%s3 + $0x28] sm:$0xf]
        %v780 = vld [vmem:[%s3 + $0x2c] sm:$0xf]
        %v781 = vld [vmem:[%s3 + $0x30] sm:$0xf]
        %v782 = vld [vmem:[%s3 + $0x34] sm:$0xf]
        %v783 = vld [vmem:[%s3 + $0x38] sm:$0xf]
        %v784 = vld [vmem:[%s3 + $0x3c] sm:$0xf]
        %v785 = vpack.c.bf16 %v754, %v753
        %v786 = vpack.c.bf16 %v756, %v755
        %v787 = vpack.c.bf16 %v758, %v757
        %v788 = vpack.c.bf16 %v760, %v759
        %v789 = vpack.c.bf16 %v762, %v761
        %v790 = vpack.c.bf16 %v764, %v763
        %v791 = vpack.c.bf16 %v766, %v765
        %v792 = vpack.c.bf16 %v768, %v767
        %v793 = vld [vmem:[%s4] sm:$0xff]
        %v794 = vld [vmem:[%s4 + $0x8] sm:$0xff]
        %v795 = vld [vmem:[%s4 + $0x10] sm:$0xff]
        %v796 = vld [vmem:[%s4 + $0x18] sm:$0xff]
        %v797 = vld [vmem:[%s4 + $0x20] sm:$0xff]
        %v798 = vld [vmem:[%s4 + $0x28] sm:$0xff]
        %v799 = vld [vmem:[%s4 + $0x30] sm:$0xff]
        %v800 = vld [vmem:[%s4 + $0x38] sm:$0xff]
        %v801 = vld [vmem:[%s4 + $0x40] sm:$0xff]
        %v802 = vld [vmem:[%s4 + $0x48] sm:$0xff]
        %v803 = vld [vmem:[%s4 + $0x50] sm:$0xff]
        %v804 = vld [vmem:[%s4 + $0x58] sm:$0xff]
        %v805 = vld [vmem:[%s4 + $0x60] sm:$0xff]
        %v806 = vld [vmem:[%s4 + $0x68] sm:$0xff]
        %v807 = vld [vmem:[%s4 + $0x70] sm:$0xff]
        %v808 = vld [vmem:[%s4 + $0x78] sm:$0xff]
        %810 = vset.pattern.permute.xlu0 0
        %811 = vperm.xlu0 %810, %v793
        %v812 = vpop.permute.xlu0 %811
        %815 = vset.pattern.permute.xlu0 0
        %816 = vperm.xlu0 %815, %v794
        %v817 = vpop.permute.xlu0 %816
        %820 = vset.pattern.permute.xlu0 0
        %821 = vperm.xlu0 %820, %v795
        %v822 = vpop.permute.xlu0 %821
        %825 = vset.pattern.permute.xlu0 0
        %826 = vperm.xlu0 %825, %v796
        %v827 = vpop.permute.xlu0 %826
        %830 = vset.pattern.permute.xlu0 0
        %831 = vperm.xlu0 %830, %v797
        %v832 = vpop.permute.xlu0 %831
        %835 = vset.pattern.permute.xlu0 0
        %836 = vperm.xlu0 %835, %v798
        %v837 = vpop.permute.xlu0 %836
        %840 = vset.pattern.permute.xlu0 0
        %841 = vperm.xlu0 %840, %v799
        %v842 = vpop.permute.xlu0 %841
        %845 = vset.pattern.permute.xlu0 0
        %846 = vperm.xlu0 %845, %v800
        %v847 = vpop.permute.xlu0 %846
        %850 = vset.pattern.permute.xlu0 0
        %851 = vperm.xlu0 %850, %v801
        %v852 = vpop.permute.xlu0 %851
        %855 = vset.pattern.permute.xlu0 0
        %856 = vperm.xlu0 %855, %v802
        %v857 = vpop.permute.xlu0 %856
        %860 = vset.pattern.permute.xlu0 0
        %861 = vperm.xlu0 %860, %v803
        %v862 = vpop.permute.xlu0 %861
        %865 = vset.pattern.permute.xlu0 0
        %866 = vperm.xlu0 %865, %v804
        %v867 = vpop.permute.xlu0 %866
        %870 = vset.pattern.permute.xlu0 0
        %871 = vperm.xlu0 %870, %v805
        %v872 = vpop.permute.xlu0 %871
        %875 = vset.pattern.permute.xlu0 0
        %876 = vperm.xlu0 %875, %v806
        %v877 = vpop.permute.xlu0 %876
        %880 = vset.pattern.permute.xlu0 0
        %881 = vperm.xlu0 %880, %v807
        %v882 = vpop.permute.xlu0 %881
        %885 = vset.pattern.permute.xlu0 0
        %886 = vperm.xlu0 %885, %v808
        %v887 = vpop.permute.xlu0 %886
        %v905 = vunpack.c.l.b16 %v769
        %v906 = vunpack.c.l.b16 %v770
        %v907 = vunpack.c.l.b16 %v771
        %v908 = vunpack.c.l.b16 %v772
        %v909 = vunpack.c.l.b16 %v773
        %v910 = vunpack.c.l.b16 %v774
        %v911 = vunpack.c.l.b16 %v775
        %v912 = vunpack.c.l.b16 %v776
        %v913 = vunpack.c.l.b16 %v777
        %v914 = vunpack.c.l.b16 %v778
        %v915 = vunpack.c.l.b16 %v779
        %v916 = vunpack.c.l.b16 %v780
        %v917 = vunpack.c.l.b16 %v781
        %v918 = vunpack.c.l.b16 %v782
        %v919 = vunpack.c.l.b16 %v783
        %v920 = vunpack.c.l.b16 %v784
        %v921 = vpack.c.b16 %v906, %v905
        %v922 = vpack.c.b16 %v908, %v907
        %v923 = vpack.c.b16 %v910, %v909
        %v924 = vpack.c.b16 %v912, %v911
        %v925 = vpack.c.b16 %v914, %v913
        %v926 = vpack.c.b16 %v916, %v915
        %v927 = vpack.c.b16 %v918, %v917
        %v928 = vpack.c.b16 %v920, %v919
        %937 = vmatprep.subr.bf16.mxu0 0
        %938 = vmatpush1.bf16.msra.mxu0 %v785
        %939 = vmatprep.subr.bf16.mxu0 0
        %940 = vmatpush1.bf16.msra.mxu0 %v786
        %941 = vmatprep.subr.bf16.mxu0 0
        %942 = vmatpush1.bf16.msra.mxu0 %v787
        %943 = vmatprep.subr.bf16.mxu0 0
        %944 = vmatpush1.bf16.msra.mxu0 %v788
        %945 = vmatprep.subr.bf16.mxu0 0
        %946 = vmatpush1.bf16.msra.mxu0 %v789
        %947 = vmatprep.subr.bf16.mxu0 0
        %948 = vmatpush1.bf16.msra.mxu0 %v790
        %949 = vmatprep.subr.bf16.mxu0 0
        %950 = vmatpush1.bf16.msra.mxu0 %v791
        %951 = vmatprep.subr.bf16.mxu0 0
        %952 = vmatpush1.bf16.msra.mxu0 %v792
        %953 = vmatprep.subr.bf16.mxu0 0
        %954 = vmatpush1.bf16.msra.mxu0 0
        %955 = vmatprep.subr.bf16.mxu0 0
        %956 = vmatpush1.bf16.msra.mxu0 0
        %957 = vmatprep.subr.bf16.mxu0 0
        %958 = vmatpush1.bf16.msra.mxu0 0
        %959 = vmatprep.subr.bf16.mxu0 0
        %960 = vmatpush1.bf16.msra.mxu0 0
        %961 = vmatprep.subr.bf16.mxu0 0
        %962 = vmatpush1.bf16.msra.mxu0 0
        %963 = vmatprep.subr.bf16.mxu0 0
        %964 = vmatpush1.bf16.msra.mxu0 0
        %965 = vmatprep.subr.bf16.mxu0 0
        %966 = vmatpush1.bf16.msra.mxu0 0
        %967 = vmatprep.subr.bf16.mxu0 0
        %968 = vmatpush1.bf16.msra.mxu0 0
        %969 = vmatprep.mubr.bf16.mxu0 0
        %970 = vmatmul.mubr.bf16.gmra.mrb[0].mxu0 %v921
        %v971 = vpop.f32.mrb[0].mxu0
        %v972 = vadd.f32 %v812, %v971
        %v973 = vpop.f32.mrb[0].mxu0
        %v974 = vpop.f32.mrb[0].mxu0
        %v975 = vadd.f32 %v817, %v974
        %v976 = vpop.f32.mrb[0].mxu0
        %977 = vmatprep.mubr.bf16.mxu0 0
        %978 = vmatmul.mubr.bf16.gmra.mrb[0].mxu0 %v922
        %v979 = vpop.f32.mrb[0].mxu0
        %v980 = vadd.f32 %v822, %v979
        %v981 = vpop.f32.mrb[0].mxu0
        %v982 = vpop.f32.mrb[0].mxu0
        %v983 = vadd.f32 %v827, %v982
        %v984 = vpop.f32.mrb[0].mxu0
        %985 = vmatprep.mubr.bf16.mxu0 0
        %986 = vmatmul.mubr.bf16.gmra.mrb[0].mxu0 %v923
        %v987 = vpop.f32.mrb[0].mxu0
        %v988 = vadd.f32 %v832, %v987
        %v989 = vpop.f32.mrb[0].mxu0
        %v990 = vpop.f32.mrb[0].mxu0
        %v991 = vadd.f32 %v837, %v990
        %v992 = vpop.f32.mrb[0].mxu0
        %993 = vmatprep.mubr.bf16.mxu0 0
        %994 = vmatmul.mubr.bf16.gmra.mrb[0].mxu0 %v924
        %v995 = vpop.f32.mrb[0].mxu0
        %v996 = vadd.f32 %v842, %v995
        %v997 = vpop.f32.mrb[0].mxu0
        %v998 = vpop.f32.mrb[0].mxu0
        %v999 = vadd.f32 %v847, %v998
        %v1000 = vpop.f32.mrb[0].mxu0
        %1001 = vmatprep.mubr.bf16.mxu0 0
        %1002 = vmatmul.mubr.bf16.gmra.mrb[0].mxu0 %v925
        %v1003 = vpop.f32.mrb[0].mxu0
        %v1004 = vadd.f32 %v852, %v1003
        %v1005 = vpop.f32.mrb[0].mxu0
        %v1006 = vpop.f32.mrb[0].mxu0
        %v1007 = vadd.f32 %v857, %v1006
        %v1008 = vpop.f32.mrb[0].mxu0
        %1009 = vmatprep.mubr.bf16.mxu0 0
        %1010 = vmatmul.mubr.bf16.gmra.mrb[0].mxu0 %v926
        %v1011 = vpop.f32.mrb[0].mxu0
        %v1012 = vadd.f32 %v862, %v1011
        %v1013 = vpop.f32.mrb[0].mxu0
        %v1014 = vpop.f32.mrb[0].mxu0
        %v1015 = vadd.f32 %v867, %v1014
        %v1016 = vpop.f32.mrb[0].mxu0
        %1017 = vmatprep.mubr.bf16.mxu0 0
        %1018 = vmatmul.mubr.bf16.gmra.mrb[0].mxu0 %v927
        %v1019 = vpop.f32.mrb[0].mxu0
        %v1020 = vadd.f32 %v872, %v1019
        %v1021 = vpop.f32.mrb[0].mxu0
        %v1022 = vpop.f32.mrb[0].mxu0
        %v1023 = vadd.f32 %v877, %v1022
        %v1024 = vpop.f32.mrb[0].mxu0
        %1025 = vmatprep.mubr.bf16.mxu0 0
        %1026 = vmatmul.mubr.bf16.gmra.mrb[0].mxu0 %v928
        %v1027 = vpop.f32.mrb[0].mxu0
        %v1028 = vadd.f32 %v882, %v1027
        %v1029 = vpop.f32.mrb[0].mxu0
        %v1030 = vpop.f32.mrb[0].mxu0
        %v1031 = vadd.f32 %v887, %v1030
        %v1032 = vpop.f32.mrb[0].mxu0
        %1033 = vdwg.mxu0
        %v1034 = vtanh.pop %v972
        %v1035 = vtanh.pop %v975
        %v1036 = vtanh.pop %v980
        %v1037 = vtanh.pop %v983
        %v1038 = vtanh.pop %v988
        %v1039 = vtanh.pop %v991
        %v1040 = vtanh.pop %v996
        %v1041 = vtanh.pop %v999
        %v1042 = vtanh.pop %v1004
        %v1043 = vtanh.pop %v1007
        %v1044 = vtanh.pop %v1012
        %v1045 = vtanh.pop %v1015
        %v1046 = vtanh.pop %v1020
        %v1047 = vtanh.pop %v1023
        %v1048 = vtanh.pop %v1028
        %v1049 = vtanh.pop %v1031
        %v1050 = vld [vmem:[%s5] sm:$0xff]
        %v1051 = vld [vmem:[%s5 + $0x8] sm:$0xff]
        %v1052 = vld [vmem:[%s5 + $0x10] sm:$0xff]
        %v1053 = vld [vmem:[%s5 + $0x18] sm:$0xff]
        %v1054 = vld [vmem:[%s5 + $0x20] sm:$0xff]
        %v1055 = vld [vmem:[%s5 + $0x28] sm:$0xff]
        %v1056 = vld [vmem:[%s5 + $0x30] sm:$0xff]
        %v1057 = vld [vmem:[%s5 + $0x38] sm:$0xff]
        %v1058 = vld [vmem:[%s5 + $0x40] sm:$0xff]
        %v1059 = vld [vmem:[%s5 + $0x48] sm:$0xff]
        %v1060 = vld [vmem:[%s5 + $0x50] sm:$0xff]
        %v1061 = vld [vmem:[%s5 + $0x58] sm:$0xff]
        %v1062 = vld [vmem:[%s5 + $0x60] sm:$0xff]
        %v1063 = vld [vmem:[%s5 + $0x68] sm:$0xff]
        %v1064 = vld [vmem:[%s5 + $0x70] sm:$0xff]
        %v1065 = vld [vmem:[%s5 + $0x78] sm:$0xff]
        %1067 = vset.pattern.permute.xlu0 0
        %1068 = vperm.xlu0 %1067, %v1050
        %v1069 = vpop.permute.xlu0 %1068
        %1072 = vset.pattern.permute.xlu0 0
        %1073 = vperm.xlu0 %1072, %v1051
        %v1074 = vpop.permute.xlu0 %1073
        %1077 = vset.pattern.permute.xlu0 0
        %1078 = vperm.xlu0 %1077, %v1052
        %v1079 = vpop.permute.xlu0 %1078
        %1082 = vset.pattern.permute.xlu0 0
        %1083 = vperm.xlu0 %1082, %v1053
        %v1084 = vpop.permute.xlu0 %1083
        %1087 = vset.pattern.permute.xlu0 0
        %1088 = vperm.xlu0 %1087, %v1054
        %v1089 = vpop.permute.xlu0 %1088
        %1092 = vset.pattern.permute.xlu0 0
        %1093 = vperm.xlu0 %1092, %v1055
        %v1094 = vpop.permute.xlu0 %1093
        %1097 = vset.pattern.permute.xlu0 0
        %1098 = vperm.xlu0 %1097, %v1056
        %v1099 = vpop.permute.xlu0 %1098
        %1102 = vset.pattern.permute.xlu0 0
        %1103 = vperm.xlu0 %1102, %v1057
        %v1104 = vpop.permute.xlu0 %1103
        %1107 = vset.pattern.permute.xlu0 0
        %1108 = vperm.xlu0 %1107, %v1058
        %v1109 = vpop.permute.xlu0 %1108
        %1112 = vset.pattern.permute.xlu0 0
        %1113 = vperm.xlu0 %1112, %v1059
        %v1114 = vpop.permute.xlu0 %1113
        %1117 = vset.pattern.permute.xlu0 0
        %1118 = vperm.xlu0 %1117, %v1060
        %v1119 = vpop.permute.xlu0 %1118
        %1122 = vset.pattern.permute.xlu0 0
        %1123 = vperm.xlu0 %1122, %v1061
        %v1124 = vpop.permute.xlu0 %1123
        %1127 = vset.pattern.permute.xlu0 0
        %1128 = vperm.xlu0 %1127, %v1062
        %v1129 = vpop.permute.xlu0 %1128
        %1132 = vset.pattern.permute.xlu0 0
        %1133 = vperm.xlu0 %1132, %v1063
        %v1134 = vpop.permute.xlu0 %1133
        %1137 = vset.pattern.permute.xlu0 0
        %1138 = vperm.xlu0 %1137, %v1064
        %v1139 = vpop.permute.xlu0 %1138
        %1142 = vset.pattern.permute.xlu0 0
        %1143 = vperm.xlu0 %1142, %v1065
        %v1144 = vpop.permute.xlu0 %1143
        %v1146 = vmul.f32 %v1034, %v1069
        %v1147 = vmul.f32 %v1035, %v1074
        %v1148 = vmul.f32 %v1036, %v1079
        %v1149 = vmul.f32 %v1037, %v1084
        %v1150 = vmul.f32 %v1038, %v1089
        %v1151 = vmul.f32 %v1039, %v1094
        %v1152 = vmul.f32 %v1040, %v1099
        %v1153 = vmul.f32 %v1041, %v1104
        %v1154 = vmul.f32 %v1042, %v1109
        %v1155 = vmul.f32 %v1043, %v1114
        %v1156 = vmul.f32 %v1044, %v1119
        %v1157 = vmul.f32 %v1045, %v1124
        %v1158 = vmul.f32 %v1046, %v1129
        %v1159 = vmul.f32 %v1047, %v1134
        %v1160 = vmul.f32 %v1048, %v1139
        %v1161 = vmul.f32 %v1049, %v1144
        %v1162 = vadd.f32 %v1146, %v1147
        %v1163 = vadd.f32 %v1162, %v1148
        %v1164 = vadd.f32 %v1163, %v1149
        %v1165 = vadd.f32 %v1164, %v1150
        %v1166 = vadd.f32 %v1165, %v1151
        %v1167 = vadd.f32 %v1166, %v1152
        %v1168 = vadd.f32 %v1167, %v1153
        %v1169 = vadd.f32 %v1168, %v1154
        %v1170 = vadd.f32 %v1169, %v1155
        %v1171 = vadd.f32 %v1170, %v1156
        %v1172 = vadd.f32 %v1171, %v1157
        %v1173 = vadd.f32 %v1172, %v1158
        %v1174 = vadd.f32 %v1173, %v1159
        %v1175 = vadd.f32 %v1174, %v1160
        %v1176 = vadd.f32 %v1175, %v1161
        %v1177 = vrot.slane %v1176, 4
        %v1178 = vadd.f32 %v1176, %v1177
        %v1179 = vrot.slane %v1178, 2
        %v1180 = vadd.f32 %v1178, %v1179
        %v1181 = vrot.slane %v1180, 1
        %v1182 = vadd.f32 %v1180, %v1181
        %v1183 = vld [vmem:[#allocation2] sm:$0x1]
        %1185 = vset.pattern.permute.xlu0 0
        %1186 = vperm.xlu0 %1185, %v1183
        %v1187 = vpop.permute.xlu0 %1186
        %v1189 = vlaneseq
        %v1190 = vshrl.u32 %v1189, 7
        %v1191 = vsub.s32 0, %v1190
        %v1192 = vrot.slane %v1187, %v1191
        %v1193 = vadd.f32 %v1182, %v1192
        %1194 = vst [vmem:[%s273] sm:$0x1] %v1193
        %s1195 = sand.u32 %s183, 1
        %s1196 = scalar_lea.sflag [#allocation4], %s1195
        %s1197 = sand.u32 %s183, 1
        %s1198 = scalar_lea.vmem [#allocation3], %s1197
        // Predicated region
        $region49: #{tpu_custom_call.1} parent=47 // pred_check
          %p1199 = pneg %p193
        $region50: #{tpu_custom_call.1} parent=47 // pred_check_branch
          %1201 = sbr.rel (%p1199) target = $region52
        $region51: #{tpu_custom_call.1} parent=47 // pred_region
          %s1203 = ssub.s32 16, 16
          %1204 = vsyncadd %s1196, %s1203
          %s1205 = smul.addr %s23, 16
          %s1206 = scalar_lea.hbm %s7, %s1205
          %s1208 = sshll.u32 %s1198, 4
          %s1209 = int_to_ptr.vmem [resolvable:$true] %s1208
          %1211 = dma.vmem_to_hbm [thread:$0]  %s1209, 16, %s1206, %s1196
        $region52: #{tpu_custom_call.1} parent=47 // pred_fallthru
          _
      $region48: #{tpu_custom_call.1} parent=5 // pred_fallthru
        _
      %p1212 = scmp.le.s32.totalorder 2, %s18
      // Predicated region
      $region53: #{tpu_custom_call.1} parent=5 // pred_check
        %p1213 = pneg %p1212
      $region54: #{tpu_custom_call.1} parent=5 // pred_check_branch
        %1215 = sbr.rel (%p1213) target = $region56
      $region55: #{tpu_custom_call.1} parent=5 // pred_region
        %s1216 = ssub.s32 %s18, 2
        // Predicated region
        $region57: #{tpu_custom_call.1} parent=55 // pred_check
          %p1217 = pneg %p199
        $region58: #{tpu_custom_call.1} parent=55 // pred_check_branch
          %1219 = sbr.rel (%p1217) target = $region60
        $region59: #{tpu_custom_call.1} parent=55 // pred_region
          %s1220 = sand.u32 %s184, 1
          %s1221 = scalar_lea.sflag [#allocation4], %s1220
          %s1222 = sand.u32 %s184, 1
          %s1223 = scalar_lea.vmem [#allocation3], %s1222
          %1224 = dma.done %s1221, 16
        $region60: #{tpu_custom_call.1} parent=55 // pred_fallthru
          _
      $region56: #{tpu_custom_call.1} parent=5 // pred_fallthru
        _
    $region6: #{tpu_custom_call.1} parent=1 // loop_footer
      %s22 = sadd.s32 1, %s18
    $region7: #{tpu_custom_call.1} parent=1 // loop_footer_branch
      %17 = sbr.rel target = $region3
    $region8: #{tpu_custom_call.1} parent=1 // loop_exit
      _
    %1225 = vsyncpa [#allocation4], 1
    %s1226 = scalar_lea.sflag [#allocation4], 1
    %1227 = vsyncpa %s1226, 1

</llo_original>
